<compile_context>
chip_gen: v6e
topology: v6e:2x2x1
jax: 0.10.0
libtpu: 0.0.40
codegen_flags: <defaults>
</compile_context>

<pallas_src>
import functools
import math

import jax
import jax.numpy as jnp
from jax.experimental import pallas as pl
from jax.experimental.pallas import tpu as pltpu

EPS = 1e-07                     # RCE softmax clamp lower bound (module-level `eps`)
ANL_CLAMP_MIN = 1e-05
LOG_ANL_CLAMP_MIN = float(math.log(ANL_CLAMP_MIN))
ONEHOT_CLAMP_MIN = 1e-04
NEG_LOG_ONEHOT_MIN = float(-math.log(ONEHOT_CLAMP_MIN))   # -log(1e-4)


def _anl_rce_kernel(pred_ref, labels_ref, out_ref, acc_ref, *,
                    n_actual, tile_n, num_classes, a, p,
                    c_anl, c_rce_neglog, needs_mask):
    ci = pl.program_id(0)          # TensorCore split (parallel)
    ti = pl.program_id(1)          # batch tile within this core (arbitrary)
    n_inner = pl.num_programs(1)

    @pl.when(ti == 0)
    def _init():
        acc_ref[...] = jnp.zeros_like(acc_ref)

    x = pred_ref[...].astype(jnp.float32)          # (C, T)  class-major
    lab = labels_ref[...]                          # (1, T)  int32

    # --- numerically stable softmax pieces over the class (sublane) axis ---
    m = jnp.max(x, axis=0, keepdims=True)          # (1, T)
    xm = x - m                                     # (C, T)
    e = jnp.exp(xm)                                # (C, T)
    denom = jnp.sum(e, axis=0, keepdims=True)      # (1, T)
    inv_denom = pl.reciprocal(denom, approx=False)
    log_denom = jnp.log(denom)                     # one log / sample

    cls = jax.lax.broadcasted_iota(jnp.int32, (num_classes, tile_n), 0)
    is_label = (cls == lab)                        # (C, T) bool, never f32

    sm = e * inv_denom                             # softmax (<= 1)
    p_rce = jnp.maximum(sm, EPS)                   # upper clamp is a no-op

    # ANL non-label element in log-space: clip(sm,1e-5,1)^p
    anl_pow = jnp.exp(p * jnp.maximum(xm - log_denom, LOG_ANL_CLAMP_MIN))

    # Fused per-element contribution; the label class contributes 0 here
    # (its ANL term is added below, its RCE term is exactly 0).
    elem = jnp.where(is_label, 0.0, c_anl * anl_pow + c_rce_neglog * p_rce)
    combined = jnp.sum(elem, axis=0, keepdims=True)              # (1, T)

    # Label-class ANL correction: |a - clip(sm[label],1e-5,1)|^p (1 pow/sample)
    sm_label = jnp.sum(jnp.where(is_label, sm, 0.0), axis=0, keepdims=True)
    sm_label = jnp.maximum(sm_label, ANL_CLAMP_MIN)
    combined = combined + c_anl * jnp.power(jnp.abs(a - sm_label), p)

    if needs_mask:  # static: only emitted when the batch does not tile evenly
        g = ci * n_inner + ti
        tile_has_pad = (g + 1) * tile_n > n_actual

        @pl.when(tile_has_pad)
        def _acc_masked():
            col = g * tile_n + jax.lax.broadcasted_iota(
                jnp.int32, (1, tile_n), 1)
            acc_ref[...] += jnp.where(col < n_actual, combined, 0.0)

        @pl.when(jnp.logical_not(tile_has_pad))
        def _acc_plain():
            acc_ref[...] += combined
    else:
        acc_ref[...] += combined

    @pl.when(ti == n_inner - 1)
    def _finalize():
        out_ref[0, 0] = jnp.sum(acc_ref[...])      # per-core partial sum


def _detect_num_cores():
    """TensorCores per chip: 2 on megacore-style parts, else 1."""
    try:
        nc = getattr(jax.devices()[0], "num_cores", None)
        if nc is not None:
            return max(1, min(2, int(nc)))
    except Exception:
        pass
    return 1


def anl_and_rce_loss(pred, labels, *, num_classes=10, alpha=1.0, beta=1.0,
                     a=2.0, p=0.7, max_tile_n=32768, num_cores=None):
    """pred: (N, C) logits (f32 or bf16), labels: (N,) int. Returns scalar."""
    n, c = pred.shape
    assert c == num_classes and n >= 1
    a = float(a); p = float(p); alpha = float(alpha); beta = float(beta)
    if num_cores is None:
        num_cores = _detect_num_cores()

    # Lane-dense batch tile: multiple of 128 lanes, capped at max_tile_n.
    tile_n = min(int(max_tile_n), ((n + 127) // 128) * 128)
    assert tile_n % 128 == 0
    n_tiles_valid = -(-n // tile_n)
    n_tiles = ((n_tiles_valid + num_cores - 1) // num_cores) * num_cores
    n_inner = n_tiles // num_cores
    needs_mask = (n_tiles * tile_n != n)
    last_block = n_tiles_valid - 1      # clamp target for fully-padded tiles

    # Class-major layout: classes on sublanes, batch on lanes. No padding pass.
    pred_t = jnp.transpose(pred)                                # (C, N)
    labels_row = labels.astype(jnp.int32).reshape(1, n)         # (1, N)

    kernel = functools.partial(
        _anl_rce_kernel,
        n_actual=n, tile_n=tile_n, num_classes=num_classes,
        a=a, p=p, c_anl=alpha / p,
        c_rce_neglog=beta * NEG_LOG_ONEHOT_MIN,
        needs_mask=needs_mask)

    def block_map(ci, ti):
        # Fully-out-of-bounds tiles (rounding to num_cores) re-read the last
        # valid block; their contribution is zeroed by the in-kernel mask.
        return (0, jnp.minimum(ci * n_inner + ti, last_block))

    partials = pl.pallas_call(
        kernel,
        out_shape=jax.ShapeDtypeStruct((num_cores, 1), jnp.float32),
        grid_spec=pltpu.PrefetchScalarGridSpec(
            num_scalar_prefetch=0,
            grid=(num_cores, n_inner),
            in_specs=[
                pl.BlockSpec((num_classes, tile_n), block_map),
                pl.BlockSpec((1, tile_n), block_map),
            ],
            out_specs=pl.BlockSpec((1, 1), lambda ci, ti: (ci, 0),
                                   memory_space=pltpu.SMEM),
            scratch_shapes=[pltpu.VMEM((1, tile_n), jnp.float32)],
        ),
        compiler_params=pltpu.CompilerParams(
            dimension_semantics=("parallel", "arbitrary"),
            vmem_limit_bytes=48 * 1024 * 1024),
    )(pred_t, labels_row)

    total = jnp.sum(partials)
    # Fold batch mean, the -(a-1)^p shift and the ANL scale into the epilogue.
    return total / n - (alpha / p) * (a - 1.0) ** p


def _reference(pred, labels, *, num_classes=10, alpha=1.0, beta=1.0,
               a=2.0, p=0.7):
    sm = jax.nn.softmax(pred.astype(jnp.float32), axis=1)
    y = jax.nn.one_hot(labels, num_classes, dtype=jnp.float32)
    p_anl = jnp.clip(sm, ANL_CLAMP_MIN, 1.0)
    anl = jnp.sum(jnp.abs(a * y - p_anl) ** p, axis=1) - (a - 1.0) ** p
    anl = anl.mean() * alpha / p
    p_rce = jnp.clip(sm, EPS, 1.0)
    y_cl = jnp.clip(y, ONEHOT_CLAMP_MIN, 1.0)
    rce = (-jnp.sum(p_rce * jnp.log(y_cl), axis=1)).mean() * beta
    return anl + rce


if __name__ == "__main__":
    key = jax.random.PRNGKey(0)
    k1, k2 = jax.random.split(key)

    batch, num_classes = 16, 10
    pred = jax.random.normal(k1, (batch, num_classes), dtype=jnp.float32)
    labels = jax.random.randint(k2, (batch,), 0, num_classes, dtype=jnp.int32)

    loss = anl_and_rce_loss(pred, labels, num_classes=num_classes,
                            alpha=1.0, beta=1.0, a=2.0, p=0.7)
    loss = jax.block_until_ready(loss)
    ref = _reference(pred, labels, num_classes=num_classes,
                     alpha=1.0, beta=1.0, a=2.0, p=0.7)
    assert jnp.allclose(loss, ref, rtol=1e-4, atol=1e-5), (loss, ref)

    # Multi-tile accumulation + ragged last-tile mask (no wrapper padding).
    k3, k4 = jax.random.split(k2)
    pred2 = jax.random.normal(k3, (1000, num_classes), dtype=jnp.float32)
    labels2 = jax.random.randint(k4, (1000,), 0, num_classes, dtype=jnp.int32)
    loss2 = jax.block_until_ready(
        anl_and_rce_loss(pred2, labels2, num_classes=num_classes,
                         max_tile_n=256))
    ref2 = _reference(pred2, labels2, num_classes=num_classes)
    assert jnp.allclose(loss2, ref2, rtol=1e-4, atol=1e-5), (loss2, ref2)

    # Forced 2-core split: exercises the fully-padded tile / clamped index_map
    # path and the 2-way "parallel" grid axis even on single-TC chips.
    k5, k6 = jax.random.split(k4)
    pred3 = jax.random.normal(k5, (100, num_classes), dtype=jnp.float32)
    labels3 = jax.random.randint(k6, (100,), 0, num_classes, dtype=jnp.int32)
    loss3 = jax.block_until_ready(
        anl_and_rce_loss(pred3, labels3, num_classes=num_classes,
                         num_cores=2))
    ref3 = _reference(pred3, labels3, num_classes=num_classes)
    assert jnp.allclose(loss3, ref3, rtol=1e-4, atol=1e-5), (loss3, ref3)

    print("KERNEL_OK")
</pallas_src>

<mosaic_0001>
module attributes {stable_mosaic.version = 11 : i64} {
  func.func @_anl_rce_kernel(%arg0: i32, %arg1: i32, %arg2: memref<10x128xf32, #tpu.memory_space<vmem>>, %arg3: memref<1x128xi32, #tpu.memory_space<vmem>>, %arg4: memref<1x1xf32, #tpu.memory_space<smem>>, %arg5: memref<1x128xf32, #tpu.memory_space<vmem>>) attributes {dimension_semantics = [#tpu.dimension_semantics<parallel>, #tpu.dimension_semantics<arbitrary>], iteration_bounds = array<i64: 1, 1>, scalar_prefetch = 0 : i64, scratch_operands = 1 : i64, tpu.core_type = #tpu.core_type<tc>, window_params = [{transform_indices = @transform_0, window_bounds = array<i64: 10, 128>}, {transform_indices = @transform_1, window_bounds = array<i64: 1, 128>}, {transform_indices = @transform_2, window_bounds = array<i64: 1, 1>}]} {
    %c0_i32 = arith.constant 0 : i32
    %0 = arith.cmpi eq, %arg1, %c0_i32 : i32
    %1 = arith.extui %0 : i1 to i32
    %c0_i32_0 = arith.constant 0 : i32
    %2 = arith.cmpi ne, %1, %c0_i32_0 : i32
    scf.if %2 {
      %cst_23 = arith.constant 0.000000e+00 : f32
      %64 = vector.broadcast %cst_23 : f32 to vector<1x128xf32>
      %c0_24 = arith.constant 0 : index
      %c0_25 = arith.constant 0 : index
      %65 = vector.load %arg5[%c0_24, %c0_25] : memref<1x128xf32, #tpu.memory_space<vmem>>, vector<1x128xf32>
      tpu.vector_store %arg5[%c0_24, %c0_25], %64 {strides = array<i32>} : memref<1x128xf32, #tpu.memory_space<vmem>>, vector<1x128xf32>,
    } else {
    }
    %c0 = arith.constant 0 : index
    %c0_1 = arith.constant 0 : index
    %3 = vector.load %arg2[%c0, %c0_1] : memref<10x128xf32, #tpu.memory_space<vmem>>, vector<10x128xf32>
    %c0_2 = arith.constant 0 : index
    %c0_3 = arith.constant 0 : index
    %4 = vector.load %arg3[%c0_2, %c0_3] : memref<1x128xi32, #tpu.memory_space<vmem>>, vector<1x128xi32>
    %cst = arith.constant dense<0xFF800000> : vector<128xf32>
    %5 = vector.multi_reduction <maximumf>, %3, %cst [0] : vector<10x128xf32> to vector<128xf32>
    %6 = vector.shape_cast %5 : vector<128xf32> to vector<1x128xf32>
    %7 = vector.broadcast %6 : vector<1x128xf32> to vector<10x128xf32>
    %8 = arith.subf %3, %7 : vector<10x128xf32>
    %9 = math.exp %8 : vector<10x128xf32>
    %cst_4 = arith.constant dense<0.000000e+00> : vector<128xf32>
    %10 = vector.multi_reduction <add>, %9, %cst_4 [0] : vector<10x128xf32> to vector<128xf32>
    %11 = vector.shape_cast %10 : vector<128xf32> to vector<1x128xf32>
    %12 = tpu.reciprocal %11 : vector<1x128xf32> -> vector<1x128xf32>
    %13 = math.log %11 : vector<1x128xf32>
    %14 = tpu.iota {dimensions = array<i32: 0>} : vector<10x128xi32>
    %15 = vector.broadcast %4 : vector<1x128xi32> to vector<10x128xi32>
    %16 = arith.cmpi eq, %14, %15 : vector<10x128xi32>
    %17 = vector.broadcast %12 : vector<1x128xf32> to vector<10x128xf32>
    %18 = arith.mulf %9, %17 : vector<10x128xf32>
    %cst_5 = arith.constant 1.000000e-07 : f32
    %19 = vector.broadcast %cst_5 : f32 to vector<10x128xf32>
    %20 = arith.maximumf %18, %19 : vector<10x128xf32>
    %21 = vector.broadcast %13 : vector<1x128xf32> to vector<10x128xf32>
    %22 = arith.subf %8, %21 : vector<10x128xf32>
    %cst_6 = arith.constant -11.5129251 : f32
    %23 = vector.broadcast %cst_6 : f32 to vector<10x128xf32>
    %24 = arith.maximumf %22, %23 : vector<10x128xf32>
    %cst_7 = arith.constant 0.699999988 : f32
    %25 = vector.broadcast %cst_7 : f32 to vector<10x128xf32>
    %26 = arith.mulf %25, %24 : vector<10x128xf32>
    %27 = math.exp %26 : vector<10x128xf32>
    %cst_8 = arith.constant 1.42857146 : f32
    %28 = vector.broadcast %cst_8 : f32 to vector<10x128xf32>
    %29 = arith.mulf %28, %27 : vector<10x128xf32>
    %cst_9 = arith.constant 9.21034049 : f32
    %30 = vector.broadcast %cst_9 : f32 to vector<10x128xf32>
    %31 = arith.mulf %30, %20 : vector<10x128xf32>
    %32 = arith.addf %29, %31 : vector<10x128xf32>
    %cst_10 = arith.constant 0.000000e+00 : f32
    %33 = vector.broadcast %cst_10 : f32 to vector<10x128xf32>
    %34 = arith.select %16, %33, %32 : vector<10x128xi1>, vector<10x128xf32>
    %cst_11 = arith.constant dense<0.000000e+00> : vector<128xf32>
    %35 = vector.multi_reduction <add>, %34, %cst_11 [0] : vector<10x128xf32> to vector<128xf32>
    %36 = vector.shape_cast %35 : vector<128xf32> to vector<1x128xf32>
    %cst_12 = arith.constant 0.000000e+00 : f32
    %37 = vector.broadcast %cst_12 : f32 to vector<10x128xf32>
    %38 = arith.select %16, %18, %37 : vector<10x128xi1>, vector<10x128xf32>
    %cst_13 = arith.constant dense<0.000000e+00> : vector<128xf32>
    %39 = vector.multi_reduction <add>, %38, %cst_13 [0] : vector<10x128xf32> to vector<128xf32>
    %40 = vector.shape_cast %39 : vector<128xf32> to vector<1x128xf32>
    %cst_14 = arith.constant 9.99999974E-6 : f32
    %41 = vector.broadcast %cst_14 : f32 to vector<1x128xf32>
    %42 = arith.maximumf %40, %41 : vector<1x128xf32>
    %cst_15 = arith.constant 2.000000e+00 : f32
    %43 = vector.broadcast %cst_15 : f32 to vector<1x128xf32>
    %44 = arith.subf %43, %42 : vector<1x128xf32>
    %45 = math.absf %44 : vector<1x128xf32>
    %cst_16 = arith.constant 0.699999988 : f32
    %46 = vector.broadcast %cst_16 : f32 to vector<1x128xf32>
    %47 = math.powf %45, %46 : vector<1x128xf32>
    %cst_17 = arith.constant 1.42857146 : f32
    %48 = vector.broadcast %cst_17 : f32 to vector<1x128xf32>
    %49 = arith.mulf %48, %47 : vector<1x128xf32>
    %50 = arith.addf %36, %49 : vector<1x128xf32>
    %c1_i32 = arith.constant 1 : i32
    %51 = arith.muli %arg0, %c1_i32 : i32
    %52 = arith.addi %51, %arg1 : i32
    %c1_i32_18 = arith.constant 1 : i32
    %53 = arith.addi %52, %c1_i32_18 : i32
    %c128_i32 = arith.constant 128 : i32
    %54 = arith.muli %53, %c128_i32 : i32
    %c16_i32 = arith.constant 16 : i32
    %55 = arith.cmpi sgt, %54, %c16_i32 : i32
    %56 = arith.extui %55 : i1 to i32
    %c0_i32_19 = arith.constant 0 : i32
    %57 = arith.cmpi ne, %56, %c0_i32_19 : i32
    scf.if %57 {
      %c128_i32_23 = arith.constant 128 : i32
      %64 = arith.muli %52, %c128_i32_23 : i32
      %65 = tpu.iota {dimensions = array<i32: 1>} : vector<1x128xi32>
      %66 = vector.broadcast %64 : i32 to vector<1x128xi32>
      %67 = arith.addi %66, %65 : vector<1x128xi32>
      %c0_24 = arith.constant 0 : index
      %c0_25 = arith.constant 0 : index
      %68 = vector.load %arg5[%c0_24, %c0_25] : memref<1x128xf32, #tpu.memory_space<vmem>>, vector<1x128xf32>
      %c16_i32_26 = arith.constant 16 : i32
      %69 = vector.broadcast %c16_i32_26 : i32 to vector<1x128xi32>
      %70 = arith.cmpi slt, %67, %69 : vector<1x128xi32>
      %cst_27 = arith.constant 0.000000e+00 : f32
      %71 = vector.broadcast %cst_27 : f32 to vector<1x128xf32>
      %72 = arith.select %70, %50, %71 : vector<1x128xi1>, vector<1x128xf32>
      %73 = arith.addf %68, %72 : vector<1x128xf32>
      %c0_28 = arith.constant 0 : index
      %c0_29 = arith.constant 0 : index
      %74 = vector.load %arg5[%c0_28, %c0_29] : memref<1x128xf32, #tpu.memory_space<vmem>>, vector<1x128xf32>
      tpu.vector_store %arg5[%c0_28, %c0_29], %73 {strides = array<i32>} : memref<1x128xf32, #tpu.memory_space<vmem>>, vector<1x128xf32>,
    } else {
    }
    %true = arith.constant true
    %58 = arith.xori %55, %true : i1
    %59 = arith.extui %58 : i1 to i32
    %c0_i32_20 = arith.constant 0 : i32
    %60 = arith.cmpi ne, %59, %c0_i32_20 : i32
    scf.if %60 {
      %c0_23 = arith.constant 0 : index
      %c0_24 = arith.constant 0 : index
      %64 = vector.load %arg5[%c0_23, %c0_24] : memref<1x128xf32, #tpu.memory_space<vmem>>, vector<1x128xf32>
      %65 = arith.addf %64, %50 : vector<1x128xf32>
      %c0_25 = arith.constant 0 : index
      %c0_26 = arith.constant 0 : index
      %66 = vector.load %arg5[%c0_25, %c0_26] : memref<1x128xf32, #tpu.memory_space<vmem>>, vector<1x128xf32>
      tpu.vector_store %arg5[%c0_25, %c0_26], %65 {strides = array<i32>} : memref<1x128xf32, #tpu.memory_space<vmem>>, vector<1x128xf32>,
    } else {
    }
    %c0_i32_21 = arith.constant 0 : i32
    %61 = arith.cmpi eq, %arg1, %c0_i32_21 : i32
    %62 = arith.extui %61 : i1 to i32
    %c0_i32_22 = arith.constant 0 : i32
    %63 = arith.cmpi ne, %62, %c0_i32_22 : i32
    scf.if %63 {
      %c0_23 = arith.constant 0 : index
      %c0_24 = arith.constant 0 : index
      %64 = vector.load %arg5[%c0_23, %c0_24] : memref<1x128xf32, #tpu.memory_space<vmem>>, vector<1x128xf32>
      %65 = vector.shape_cast %64 : vector<1x128xf32> to vector<1x1x128xf32>
      %cst_25 = arith.constant dense<0.000000e+00> : vector<1xf32>
      %66 = vector.multi_reduction <add>, %65, %cst_25 [1, 2] : vector<1x1x128xf32> to vector<1xf32>
      %67 = vector.shape_cast %66 : vector<1xf32> to vector<1x1x1xf32>
      %68 = vector.extract %67[0, 0, 0] : f32 from vector<1x1x1xf32>
      %c0_26 = arith.constant 0 : index
      %c0_27 = arith.constant 0 : index
      %69 = memref.load %arg4[%c0_26, %c0_27] : memref<1x1xf32, #tpu.memory_space<smem>>
      memref.store %68, %arg4[%c0_26, %c0_27] : memref<1x1xf32, #tpu.memory_space<smem>>
    } else {
    }
    return
  }
  func.func @transform_0(%arg0: i32, %arg1: i32) -> (i32, i32) {
    %c1_i32 = arith.constant 1 : i32
    %0 = arith.muli %arg0, %c1_i32 : i32
    %1 = arith.addi %0, %arg1 : i32
    %c0_i32 = arith.constant 0 : i32
    %2 = arith.minsi %1, %c0_i32 : i32
    %c0_i32_0 = arith.constant 0 : i32
    %c0_i32_1 = arith.constant 0 : i32
    return %c0_i32_0, %2 : i32, i32
  }
  func.func @transform_1(%arg0: i32, %arg1: i32) -> (i32, i32) {
    %c1_i32 = arith.constant 1 : i32
    %0 = arith.muli %arg0, %c1_i32 : i32
    %1 = arith.addi %0, %arg1 : i32
    %c0_i32 = arith.constant 0 : i32
    %2 = arith.minsi %1, %c0_i32 : i32
    %c0_i32_0 = arith.constant 0 : i32
    %c0_i32_1 = arith.constant 0 : i32
    return %c0_i32_0, %2 : i32, i32
  }
  func.func @transform_2(%arg0: i32, %arg1: i32) -> (i32, i32) {
    %c0_i32 = arith.constant 0 : i32
    %c0_i32_0 = arith.constant 0 : i32
    return %arg0, %c0_i32 : i32, i32
  }
}

</mosaic_0001>

<llo_original>
// kernel: tpu_custom_call.1
$region0: #{tpu_custom_call.1}
  #allocation0 [shape = 'u32[]', space=smem, size = 0x4, offset = 0x4, fixed_abs, tag = 'smem constant byte address 0x4 - core index']
  #allocation1 [shape = 'u32[144,128]{1,0:T(1,128)}', space=vmem, size = 0x12000, scoped, tag = 'internal scratch']
  #allocation2 [shape = 'f32[1,128]{1,0:T(1,128)}', space=vmem, size = 0x200, scoped, tag = 'scratch operand']
  %s0 = inlined_call_operand.hbm [shape: f32[10,16], index: 0, kind: input, shape index: {}]
  %s1 = inlined_call_operand.vmem [shape: s32[1,16], index: 1, kind: input, shape index: {}]
  %s2 = inlined_call_operand.hbm [shape: f32[1,1], index: 2, kind: output, shape index: {}]
  %s3 = sld [smem:[#allocation0]]
  $region38: #{tpu_custom_call.1} parent=0
    _
  %s5 = ssub.s32 1, %s3
  %s6 = scalar_select 0, %s5, %s3
  $region1: #{tpu_custom_call.1} parent=0
    #allocation3 [shape = 'u8[8192]{0}', space=vmem, size = 0x2000, scoped, tag = 'input window, operand 0, single buffered']
    #allocation4 [shape = 's32[1]{0}', space=sflag, size = 0x4, scoped, tag = 'scoped memory for tpu_custom_call.1']
    #allocation5 [shape = 's32[1]{0}', space=sflag, size = 0x4, scoped, tag = 'scoped memory for tpu_custom_call.1']
    #allocation6 [shape = 'u8[512]{0}', space=smem, size = 0x200, scoped, tag = 'output window, operand 0, single buffered']
    %7 = vsyncpa [#allocation4], 0
    %8 = vsyncpa [#allocation5], 0
    // Predicated region
    $region2: #{tpu_custom_call.1} parent=1 // pred_check
      _
    $region3: #{tpu_custom_call.1} parent=1 // pred_check_branch
      %10 = sbr.rel (0) target = $region5
    $region4: #{tpu_custom_call.1} parent=1 // pred_region
      %s11 = sadd.s32 0, 0
      %p12 = scmp.lt.s32.totalorder %s11, 0
      %s13 = scalar_select %p12, %s11, 0
      %s15 = ssub.s32 256, 256
      %16 = vsyncadd [#allocation4], %s15
      %s17 = smul.addr %s13, 128
      %s18 = scalar_lea.hbm %s0, %s17
      %s19 = sshll.u32 [#allocation3], 4
      %s20 = int_to_ptr.vmem [resolvable:$true] %s19
      %25 = dma.hbm_to_vmem [thread:$0]  %s18, 256, %s20, [#allocation4], 128, 128, 8
    $region5: #{tpu_custom_call.1} parent=1 // pred_fallthru
      _
    // Predicated region
    $region6: #{tpu_custom_call.1} parent=1 // pred_check
      _
    $region7: #{tpu_custom_call.1} parent=1 // pred_check_branch
      %27 = sbr.rel (0) target = $region9
    $region8: #{tpu_custom_call.1} parent=1 // pred_region
      %s28 = sadd.s32 0, 0
      %p29 = scmp.lt.s32.totalorder %s28, 0
      %s30 = scalar_select %p29, %s28, 0
      %p31 = scmp.lt.s32.totalorder %s30, 0
      %s32 = scalar_select %p31, %s30, 0
      %s33 = scalar_lea.vmem %s1, %s32
      %s34 = sadd.s32 0, 0
      %p35 = scmp.lt.s32.totalorder %s34, 0
      %s36 = scalar_select %p35, %s34, 0
    $region9: #{tpu_custom_call.1} parent=1 // pred_fallthru
      _
    // Predicated region
    $region10: #{tpu_custom_call.1} parent=1 // pred_check
      _
    $region11: #{tpu_custom_call.1} parent=1 // pred_check_branch
      %38 = sbr.rel (0) target = $region13
    $region12: #{tpu_custom_call.1} parent=1 // pred_region
      %39 = dma.done [#allocation4], 256
    $region13: #{tpu_custom_call.1} parent=1 // pred_fallthru
      _
    %s40 = sadd.s32 0, 0
    %p41 = scmp.lt.s32.totalorder %s40, 0
    %s42 = scalar_select %p41, %s40, 0
    %p43 = scmp.lt.s32.totalorder %s42, 0
    %s44 = scalar_select %p43, %s42, 0
    %s45 = scalar_lea.vmem %s1, %s44
    %s46 = sadd.s32 0, 0
    %p47 = scmp.lt.s32.totalorder %s46, 0
    %s48 = scalar_select %p47, %s46, 0
    %s49 = sadd.s32 0, 0
    %p50 = scmp.lt.s32.totalorder %s49, 0
    %s51 = scalar_select %p50, %s49, 0
    %p52 = scmp.lt.s32.totalorder %s51, 0
    %s53 = scalar_select %p52, %s51, 0
    %s54 = scalar_lea.vmem %s1, %s53
    %s55 = sadd.s32 0, 0
    %p56 = scmp.lt.s32.totalorder %s55, 0
    %s57 = scalar_select %p56, %s55, 0
    %p58 = scmp.eq.s32.totalorder 0, 0
    // Predicated region
    $region14: #{tpu_custom_call.1} parent=1 // pred_check
      %p59 = pneg %p58
    $region15: #{tpu_custom_call.1} parent=1 // pred_check_branch
      %61 = sbr.rel (%p59) target = $region17
    $region16: #{tpu_custom_call.1} parent=1 // pred_region
      %62 = vst [vmem:[#allocation2] sm:$0x1] 0.0
    $region17: #{tpu_custom_call.1} parent=1 // pred_fallthru
      _
    %v63 = vld [vmem:[#allocation3] sm:$0xff]
    %v64 = vld [vmem:[#allocation3 + $0x8] sm:$0x3]
    %v65 = vld [vmem:[%s54] sm:$0x1]
    %vm66 = vcmask 1041408
    %v67 = vsel %vm66, %v64, -inf
    %v68 = vmax.f32 %v63, %v67
    %v69 = vrot.slane %v68, 4
    %v70 = vmax.f32 %v68, %v69
    %v71 = vrot.slane %v70, 2
    %v72 = vmax.f32 %v70, %v71
    %v73 = vrot.slane %v72, 1
    %v74 = vmax.f32 %v72, %v73
    %v75 = vsub.f32 %v63, %v74
    %v76 = vsub.f32 %v64, %v74
    %v77 = vmul.f32 %v75, 1.442695
    %v78 = vpow.pop %v77
    %v79 = vmul.f32 %v76, 1.442695
    %v80 = vpow.pop %v79
    %v81 = vsel %vm66, %v80, 0.0
    %v82 = vadd.f32 %v78, %v81
    %v83 = vrot.slane %v82, 4
    %v84 = vadd.f32 %v82, %v83
    %v85 = vrot.slane %v84, 2
    %v86 = vadd.f32 %v84, %v85
    %v87 = vrot.slane %v86, 1
    %v88 = vadd.f32 %v86, %v87
    %v89 = vrcp.pop %v88
    %v90 = vlog2.pop %v88
    %v91 = vmul.f32 %v90, 0.6931472
    %v92 = vlaneseq
    %v93 = vshrl.u32 %v92, 7
    %v94 = vadd.s32 %v93, 8
    %v95 = vlaneseq
    %v96 = vshrl.u32 %v95, 7
    %v97 = vsub.s32 0, %v96
    %v98 = vrot.slane %v65, %v97
    %vm99 = vcmp.eq.s32.totalorder %v93, %v98
    %vm100 = vcmp.eq.s32.totalorder %v94, %v98
    %v101 = vmul.f32 %v78, %v89
    %v102 = vmul.f32 %v80, %v89
    %v103 = vmax.f32 %v101, 1e-07
    %v104 = vmax.f32 %v102, 1e-07
    %v105 = vsub.f32 %v75, %v91
    %v106 = vsub.f32 %v76, %v91
    %v107 = vmax.f32 %v105, -11.512925
    %v108 = vmax.f32 %v106, -11.512925
    %v109 = vmul.f32 %v107, 0.7
    %v110 = vmul.f32 %v108, 0.7
    %v111 = vmul.f32 %v109, 1.442695
    %v112 = vpow.pop %v111
    %v113 = vmul.f32 %v110, 1.442695
    %v114 = vpow.pop %v113
    %v115 = vmul.f32 %v112, 1.4285715
    %v116 = vmul.f32 %v114, 1.4285715
    %v117 = vmul.f32 %v103, 9.2103405
    %v118 = vmul.f32 %v104, 9.2103405
    %v119 = vadd.f32 %v115, %v117
    %v120 = vadd.f32 %v116, %v118
    %v121 = vsel %vm99, 0.0, %v119
    %v122 = vsel %vm100, 0.0, %v120
    %v123 = vsel %vm66, %v122, 0.0
    %v124 = vadd.f32 %v121, %v123
    %v125 = vrot.slane %v124, 4
    %v126 = vadd.f32 %v124, %v125
    %v127 = vrot.slane %v126, 2
    %v128 = vadd.f32 %v126, %v127
    %v129 = vrot.slane %v128, 1
    %v130 = vadd.f32 %v128, %v129
    %v131 = vsel %vm99, %v101, 0.0
    %v132 = vsel %vm100, %v102, 0.0
    %v133 = vsel %vm66, %v132, 0.0
    %v134 = vadd.f32 %v131, %v133
    %v135 = vrot.slane %v134, 4
    %v136 = vadd.f32 %v134, %v135
    %v137 = vrot.slane %v136, 2
    %v138 = vadd.f32 %v136, %v137
    %v139 = vrot.slane %v138, 1
    %v140 = vadd.f32 %v138, %v139
    %v141 = vmax.f32 %v140, 1e-05
    %v142 = vsub.f32 2.0, %v141
    %v143 = vand.u32 2147483647, %v142
    %v144 = vpow.f32 %v143, 0.7
    %v145 = vmul.f32 %v144, 1.4285715
    %v146 = vadd.f32 %v130, %v145
    %s147 = sadd.s32 0, 0
    %s148 = sadd.s32 %s147, 1
    %s149 = smul.u32 %s148, 128
    %p150 = scmp.gt.s32.totalorder %s149, 16
    // Predicated region
    $region18: #{tpu_custom_call.1} parent=1 // pred_check
      %p151 = pneg %p150
    $region19: #{tpu_custom_call.1} parent=1 // pred_check_branch
      %153 = sbr.rel (%p151) target = $region21
    $region20: #{tpu_custom_call.1} parent=1 // pred_region
      %s154 = smul.u32 %s147, 128
      %v155 = vlaneseq
      %v156 = vand.u32 %v155, 127
      %v157 = vstv %s154
      %v158 = vadd.s32 %v157, %v156
      %v159 = vld [vmem:[#allocation2] sm:$0x1]
      %vm160 = vcmp.lt.s32.totalorder %v158, 16
      %v161 = vsel %vm160, %v146, 0.0
      %v162 = vadd.f32 %v159, %v161
      %163 = vst [vmem:[#allocation2] sm:$0x1] %v162
    $region21: #{tpu_custom_call.1} parent=1 // pred_fallthru
      _
    %p164 = scmp.le.s32.totalorder %s149, 16
    // Predicated region
    $region22: #{tpu_custom_call.1} parent=1 // pred_check
      %p165 = pneg %p164
    $region23: #{tpu_custom_call.1} parent=1 // pred_check_branch
      %167 = sbr.rel (%p165) target = $region25
    $region24: #{tpu_custom_call.1} parent=1 // pred_region
      %v168 = vld [vmem:[#allocation2] sm:$0x1]
      %v169 = vadd.f32 %v168, %v146
      %170 = vst [vmem:[#allocation2] sm:$0x1] %v169
    $region25: #{tpu_custom_call.1} parent=1 // pred_fallthru
      _
    // Predicated region
    $region26: #{tpu_custom_call.1} parent=1 // pred_check
      %p171 = pneg %p58
    $region27: #{tpu_custom_call.1} parent=1 // pred_check_branch
      %173 = sbr.rel (%p171) target = $region29
    $region28: #{tpu_custom_call.1} parent=1 // pred_region
      %v174 = vld [vmem:[#allocation2] sm:$0x1]
      %vm175 = vcmask 1040384
      %v176 = vsel %vm175, %v174, 0.0
      %177 = vadd.xlane.f32.xlu0 %v176
      %v178 = vpop.xlane.xlu0 %177
      %v179 = vrot.slane %v178, 4
      %v180 = vadd.f32 %v178, %v179
      %v181 = vrot.slane %v180, 2
      %v182 = vadd.f32 %v180, %v181
      %v183 = vrot.slane %v182, 1
      %v184 = vadd.f32 %v182, %v183
      %s185 = vtos %v184
      %s186 = scalar_lea.smem [#allocation6], 0
      %187 = sst [smem:[%s186]] %s185
    $region29: #{tpu_custom_call.1} parent=1 // pred_fallthru
      _
    // Predicated region
    $region30: #{tpu_custom_call.1} parent=1 // pred_check
      _
    $region31: #{tpu_custom_call.1} parent=1 // pred_check_branch
      %189 = sbr.rel (0) target = $region33
    $region32: #{tpu_custom_call.1} parent=1 // pred_region
      %s191 = ssub.s32 16, 16
      %192 = vsyncadd [#allocation5], %s191
      %195 = dma.smem_to_hbm [#allocation6], 16, %s2, [#allocation5]
    $region33: #{tpu_custom_call.1} parent=1 // pred_fallthru
      _
    // Predicated region
    $region34: #{tpu_custom_call.1} parent=1 // pred_check
      _
    $region35: #{tpu_custom_call.1} parent=1 // pred_check_branch
      %197 = sbr.rel (0) target = $region37
    $region36: #{tpu_custom_call.1} parent=1 // pred_region
      %198 = dma.done [#allocation5], 16
    $region37: #{tpu_custom_call.1} parent=1 // pred_fallthru
      _
    %199 = sfence
    %200 = vsyncpa [#allocation4], 1
    %201 = vsyncpa [#allocation5], 1

</llo_original>
